<compile_context>
chip_gen: v7x
topology: tpu7x:2x2x1
jax: 0.10.0
libtpu: 0.0.40
codegen_flags: <defaults>
</compile_context>

<pallas_src>
import functools

import jax
import jax.numpy as jnp
from jax.experimental import pallas as pl
from jax.experimental.pallas import tpu as pltpu

LN_EPS = 1e-5  # PyTorch nn.LayerNorm default eps


# ----------------------------------------------------------------------------- helpers
def _round_up(x: int, m: int) -> int:
    return ((x + m - 1) // m) * m


def _pick_tile(n: int, cap: int) -> int:
    """Largest tile <= cap that divides n (n is always a multiple of 8 here)."""
    t = min(cap, n)
    while n % t:
        t -= 8
    return max(t, 8)


def _vmem_limit_bytes() -> int:
    """Generation-aware VMEM limit: ~3/4 of physical VMEM, capped at 100 MiB.
    v5e/v6e (128 MiB) -> 96 MiB, v7x (64 MiB) -> 48 MiB; safe fallback if the query is unavailable."""
    try:
        cap = pltpu.get_tpu_info().vmem_capacity_bytes
    except Exception:
        cap = 64 * 1024 * 1024
    return int(min(cap * 3 // 4, 100 * 1024 * 1024))


# ----------------------------------------------------------------------------- kernels
def _embed_kernel(cls_ref, wt_ref, b_ref, out_ref, *, norm_embedding):
    """CLS rows -> LayerNorm (f32 stats, no affine) -> Linear; bf16 MXU operands, f32 accumulation,
    bf16 output (inter-kernel traffic halved)."""
    x = cls_ref[...]                                        # (TB, H) f32
    if norm_embedding:
        mean = jnp.mean(x, axis=-1, keepdims=True)
        cen = x - mean
        var = jnp.mean(cen * cen, axis=-1, keepdims=True)   # biased variance (PyTorch LN)
        x = cen * jax.lax.rsqrt(var + LN_EPS)
    # canonical NN matmul: weight pre-transposed to (H, E_pad) at trace time -> no per-step relayout
    y = jnp.dot(x.astype(wt_ref.dtype), wt_ref[...], preferred_element_type=jnp.float32)
    out_ref[...] = (y + b_ref[...]).astype(out_ref.dtype)


def _head_kernel(p_ref, c_ref, vw_ref, vb_ref, logit_ref, prob_ref, value_ref, *, n_cand):
    """Fused actor (scores + Categorical softmax probs) + critic value head for one prompt tile."""
    p = p_ref[...]                                          # (TM, E_pad) bf16
    c = c_ref[...]                                          # (BC_lane, E_pad) bf16 (resident)
    logits = jax.lax.dot_general(                           # (TM, BC_lane) f32 acc
        p, c, (((1,), (1,)), ((), ())), preferred_element_type=jnp.float32)
    logit_ref[...] = logits
    # softmax over the valid candidate columns only (padded columns -> -inf)
    col = jax.lax.broadcasted_iota(jnp.int32, logits.shape, 1)
    masked = jnp.where(col < n_cand, logits, -jnp.inf)
    m = jnp.max(masked, axis=-1, keepdims=True)
    e = jnp.exp(masked - m)
    denom = jnp.sum(e, axis=-1, keepdims=True)
    prob_ref[...] = e / denom                               # exact: Categorical probs sum to 1
    # critic: per-lane multiply + row reduce on VPU/XLU slack (no N=1 MXU matmul)
    pv = p.astype(jnp.float32) * vw_ref[...]                # vw in native (1, E_pad) layout
    value_ref[...] = jnp.sum(pv, axis=-1, keepdims=True) + vb_ref[...]


def _critic_kernel(p_ref, vw_ref, vb_ref, value_ref):
    pv = p_ref[...].astype(jnp.float32) * vw_ref[...]
    value_ref[...] = jnp.sum(pv, axis=-1, keepdims=True) + vb_ref[...]


# ----------------------------------------------------------------------------- pallas_call wrappers
def calc_embedding(cls_tokens, lin_wt, lin_b_row, *, tile, norm_embedding, vmem_limit):
    """cls_tokens: (B_pad, H) f32; lin_wt: (H, E_pad) bf16 (pre-transposed); lin_b_row: (1, E_pad) f32."""
    B, H = cls_tokens.shape
    E_pad = lin_wt.shape[1]
    return pl.pallas_call(
        functools.partial(_embed_kernel, norm_embedding=norm_embedding),
        out_shape=jax.ShapeDtypeStruct((B, E_pad), jnp.bfloat16),
        grid_spec=pltpu.PrefetchScalarGridSpec(
            num_scalar_prefetch=0,
            grid=(B // tile,),
            in_specs=[
                pl.BlockSpec((tile, H), lambda i: (i, 0)),       # streamed CLS rows (pipelined)
                pl.BlockSpec((H, E_pad), lambda i: (0, 0)),      # projection weight, resident
                pl.BlockSpec((1, E_pad), lambda i: (0, 0)),      # bias, resident
            ],
            out_specs=pl.BlockSpec((tile, E_pad), lambda i: (i, 0)),
        ),
        compiler_params=pltpu.CompilerParams(
            dimension_semantics=("parallel",),                   # shards across v7x's 2 TCs
            vmem_limit_bytes=vmem_limit,
        ),
    )(cls_tokens, lin_wt, lin_b_row)


def _actor_critic_head(prompt_emb, cand_emb, vw_row, vb_11, n_cand, *, tile, vmem_limit):
    Bp, E_pad = prompt_emb.shape
    Bc_lane = cand_emb.shape[0]
    return pl.pallas_call(
        functools.partial(_head_kernel, n_cand=n_cand),
        out_shape=(
            jax.ShapeDtypeStruct((Bp, Bc_lane), jnp.float32),    # logits
            jax.ShapeDtypeStruct((Bp, Bc_lane), jnp.float32),    # softmax probs (Categorical)
            jax.ShapeDtypeStruct((Bp, 1), jnp.float32),          # value
        ),
        grid_spec=pltpu.PrefetchScalarGridSpec(
            num_scalar_prefetch=0,
            grid=(Bp // tile,),                                  # gridded over the prompt axis
            in_specs=[
                pl.BlockSpec((tile, E_pad), lambda i: (i, 0)),   # prompt tile (pipelined)
                pl.BlockSpec((Bc_lane, E_pad), lambda i: (0, 0)),  # candidates, resident
                pl.BlockSpec((1, E_pad), lambda i: (0, 0)),      # value weight, resident
                pl.BlockSpec((1, 1), lambda i: (0, 0)),          # value bias, resident
            ],
            out_specs=(
                pl.BlockSpec((tile, Bc_lane), lambda i: (i, 0)),
                pl.BlockSpec((tile, Bc_lane), lambda i: (i, 0)),
                pl.BlockSpec((tile, 1), lambda i: (i, 0)),
            ),
        ),
        compiler_params=pltpu.CompilerParams(
            dimension_semantics=("parallel",),
            vmem_limit_bytes=vmem_limit,
        ),
    )(prompt_emb, cand_emb, vw_row, vb_11)


def _critic_only(prompt_emb, vw_row, vb_11, *, tile, vmem_limit):
    Bp, E_pad = prompt_emb.shape
    return pl.pallas_call(
        _critic_kernel,
        out_shape=jax.ShapeDtypeStruct((Bp, 1), jnp.float32),
        grid_spec=pltpu.PrefetchScalarGridSpec(
            num_scalar_prefetch=0,
            grid=(Bp // tile,),
            in_specs=[
                pl.BlockSpec((tile, E_pad), lambda i: (i, 0)),
                pl.BlockSpec((1, E_pad), lambda i: (0, 0)),
                pl.BlockSpec((1, 1), lambda i: (0, 0)),
            ],
            out_specs=pl.BlockSpec((tile, 1), lambda i: (i, 0)),
        ),
        compiler_params=pltpu.CompilerParams(
            dimension_semantics=("parallel",),
            vmem_limit_bytes=vmem_limit,
        ),
    )(prompt_emb, vw_row, vb_11)


# ----------------------------------------------------------------------------- forward
def language_transformer_forward(
    prompt_hidden,          # (Bp, S, H) synthetic encoder last_hidden_states for train_samples
    cand_hidden,            # (Bc, S, H) synthetic encoder last_hidden_states for candidate_samples (or None)
    lin_w, lin_b,           # add_linear=True projection: (E, H) torch layout, (E,)
    value_w, value_b,       # value_head: (1, E), (1,)
    mode="compute_actor_critic",
    norm_embedding=True,
    head_tile=256,          # 256 fills the 2x256^2 MXU on v6e/v7x; set 128 on v5e (4x128^2 MXU)
    embed_tile_cap=512,     # big tiles for the mem-bound embedding pass
):
    assert mode in ("compute_actor", "compute_critic", "compute_actor_critic")
    need_actor = mode in ("compute_actor", "compute_actor_critic")
    need_critic = mode in ("compute_critic", "compute_actor_critic")

    Bp, _, H = prompt_hidden.shape
    E = lin_w.shape[0]
    E_pad = _round_up(E, 128)                                # lane-dense embedding / head contraction
    vmem_limit = _vmem_limit_bytes()

    # Parameter re-layouts happen once (parameters, trace-time): pre-transposed bf16 projection weight,
    # zero-padded E columns -> downstream contractions stay exact.
    lin_wt = jnp.pad(lin_w.astype(jnp.float32), ((0, E_pad - E), (0, 0))).T.astype(jnp.bfloat16)  # (H, E_pad)
    lin_b_row = jnp.pad(lin_b.astype(jnp.float32), (0, E_pad - E)).reshape(1, E_pad)
    vw_row = jnp.pad(value_w.reshape(1, E).astype(jnp.float32), ((0, 0), (0, E_pad - E)))
    vb_11 = value_b.reshape(1, 1).astype(jnp.float32)

    # CLS (seq index 0) rows only; slice + batch-pad fuse into one XLA gather over (B, H) — the full
    # (B, S, H) tensor is never copied. Padding up-front means the embedding outputs already match the
    # head's tiling: no inter-kernel slice/pad copies (padded rows yield bias-only embeddings that are
    # masked to -inf columns / sliced off rows downstream).
    bp_pad = _round_up(max(Bp, 1), head_tile)
    prompt_cls = jnp.pad(prompt_hidden[:, 0, :], ((0, bp_pad - Bp), (0, 0)))
    prompt_emb = calc_embedding(
        prompt_cls, lin_wt, lin_b_row,
        tile=_pick_tile(bp_pad, embed_tile_cap),
        norm_embedding=norm_embedding, vmem_limit=vmem_limit)

    res = {}
    if need_actor:
        Bc = cand_hidden.shape[0]
        bc_lane = _round_up(max(Bc, 1), 128)                 # lane-dense logits/probs, no re-pad later
        cand_cls = jnp.pad(cand_hidden[:, 0, :], ((0, bc_lane - Bc), (0, 0)))
        cand_emb = calc_embedding(
            cand_cls, lin_wt, lin_b_row,
            tile=_pick_tile(bc_lane, embed_tile_cap),
            norm_embedding=norm_embedding, vmem_limit=vmem_limit)

        logits, probs, value = _actor_critic_head(
            prompt_emb, cand_emb, vw_row, vb_11, Bc,
            tile=head_tile, vmem_limit=vmem_limit)
        res["logit"] = logits[:Bp, :Bc]
        # 'dist': torch.distributions.Categorical(logits=scores) -> its exact softmax probs
        res["dist_probs"] = probs[:Bp, :Bc]
        if need_critic:
            res["value"] = value[:Bp]
        # compute_actor-only: the fused head also produces `value`; it is simply dropped (a per-tile
        # VPU multiply + reduce, negligible vs. a separate launch).
    elif need_critic:
        res["value"] = _critic_only(prompt_emb, vw_row, vb_11,
                                    tile=head_tile, vmem_limit=vmem_limit)[:Bp]
    return res


# ----------------------------------------------------------------------------- main
if __name__ == "__main__":
    B_PROMPT, B_CAND, SEQ, HIDDEN, EMB = 2, 3, 8, 32, 16  # small stand-ins for BERT shapes

    key = jax.random.PRNGKey(0)
    ks = jax.random.split(key, 6)
    prompt_hidden = jax.random.normal(ks[0], (B_PROMPT, SEQ, HIDDEN), jnp.float32)
    cand_hidden = jax.random.normal(ks[1], (B_CAND, SEQ, HIDDEN), jnp.float32)
    # self.linear = nn.Linear(hidden_dim, embedding_size)   (add_linear=True)
    lin_w = jax.random.normal(ks[2], (EMB, HIDDEN), jnp.float32) * 0.05
    lin_b = jax.random.normal(ks[3], (EMB,), jnp.float32) * 0.05
    # self.value_head = nn.Linear(embedding_size, 1)
    value_w = jax.random.normal(ks[4], (1, EMB), jnp.float32) * 0.05
    value_b = jax.random.normal(ks[5], (1,), jnp.float32) * 0.05

    out = language_transformer_forward(
        prompt_hidden, cand_hidden, lin_w, lin_b, value_w, value_b,
        mode="compute_actor_critic",
    )
    jax.block_until_ready(out)

    # pure-JAX f32 reference (kernels use bf16 MXU operands / bf16 intermediate embeddings)
    def ref_embed(h):
        cls = h[:, 0, :]
        mean = cls.mean(-1, keepdims=True)
        cen = cls - mean
        var = (cen * cen).mean(-1, keepdims=True)
        return (cen * jax.lax.rsqrt(var + LN_EPS)) @ lin_w.T + lin_b

    pe, ce = ref_embed(prompt_hidden), ref_embed(cand_hidden)
    ref_logit = pe @ ce.T
    ref_prob = jax.nn.softmax(ref_logit, axis=-1)
    ref_value = pe @ value_w.T + value_b

    assert out["logit"].shape == (B_PROMPT, B_CAND)
    assert out["dist_probs"].shape == (B_PROMPT, B_CAND)
    assert out["value"].shape == (B_PROMPT, 1)
    assert jnp.allclose(out["logit"], ref_logit, atol=5e-2, rtol=5e-2)
    assert jnp.allclose(out["dist_probs"], ref_prob, atol=5e-2, rtol=5e-2)
    assert jnp.allclose(out["value"], ref_value, atol=5e-2, rtol=5e-2)

    # also exercise the critic-only path
    out_c = language_transformer_forward(
        prompt_hidden, None, lin_w, lin_b, value_w, value_b, mode="compute_critic")
    jax.block_until_ready(out_c)
    assert out_c["value"].shape == (B_PROMPT, 1)
    assert jnp.allclose(out_c["value"], ref_value, atol=5e-2, rtol=5e-2)

    print("KERNEL_OK")
</pallas_src>

<mosaic_0001>
module attributes {stable_mosaic.version = 11 : i64} {
  func.func @_embed_kernel(%arg0: i32, %arg1: memref<256x32xf32, #tpu.memory_space<vmem>>, %arg2: memref<32x128xbf16, #tpu.memory_space<vmem>>, %arg3: memref<1x128xf32, #tpu.memory_space<vmem>>, %arg4: memref<256x128xbf16, #tpu.memory_space<vmem>>) attributes {dimension_semantics = [#tpu.dimension_semantics<parallel>], iteration_bounds = array<i64: 1>, scalar_prefetch = 0 : i64, scratch_operands = 0 : i64, tpu.core_type = #tpu.core_type<tc>, window_params = [{transform_indices = @transform_0, window_bounds = array<i64: 256, 32>}, {pipeline_mode = #tpu.pipeline_mode<synchronous>, transform_indices = @transform_1, window_bounds = array<i64: 32, 128>}, {pipeline_mode = #tpu.pipeline_mode<synchronous>, transform_indices = @transform_2, window_bounds = array<i64: 1, 128>}, {transform_indices = @transform_3, window_bounds = array<i64: 256, 128>}]} {
    %c0 = arith.constant 0 : index
    %c0_0 = arith.constant 0 : index
    %0 = vector.load %arg1[%c0, %c0_0] : memref<256x32xf32, #tpu.memory_space<vmem>>, vector<256x32xf32>
    %cst = arith.constant dense<0.000000e+00> : vector<256xf32>
    %1 = vector.multi_reduction <add>, %0, %cst [1] : vector<256x32xf32> to vector<256xf32>
    %2 = vector.shape_cast %1 : vector<256xf32> to vector<256x1xf32>
    %cst_1 = arith.constant 3.200000e+01 : f32
    %3 = vector.broadcast %cst_1 : f32 to vector<256x1xf32>
    %4 = arith.divf %2, %3 : vector<256x1xf32>
    %5 = vector.broadcast %4 : vector<256x1xf32> to vector<256x32xf32>
    %6 = arith.subf %0, %5 : vector<256x32xf32>
    %7 = arith.mulf %6, %6 : vector<256x32xf32>
    %cst_2 = arith.constant dense<0.000000e+00> : vector<256xf32>
    %8 = vector.multi_reduction <add>, %7, %cst_2 [1] : vector<256x32xf32> to vector<256xf32>
    %9 = vector.shape_cast %8 : vector<256xf32> to vector<256x1xf32>
    %cst_3 = arith.constant 3.200000e+01 : f32
    %10 = vector.broadcast %cst_3 : f32 to vector<256x1xf32>
    %11 = arith.divf %9, %10 : vector<256x1xf32>
    %cst_4 = arith.constant 9.99999974E-6 : f32
    %12 = vector.broadcast %cst_4 : f32 to vector<256x1xf32>
    %13 = arith.addf %11, %12 : vector<256x1xf32>
    %14 = math.rsqrt %13 : vector<256x1xf32>
    %15 = vector.broadcast %14 : vector<256x1xf32> to vector<256x32xf32>
    %16 = arith.mulf %6, %15 : vector<256x32xf32>
    %17 = arith.truncf %16 : vector<256x32xf32> to vector<256x32xbf16>
    %c0_5 = arith.constant 0 : index
    %c0_6 = arith.constant 0 : index
    %18 = vector.load %arg2[%c0_5, %c0_6] : memref<32x128xbf16, #tpu.memory_space<vmem>>, vector<32x128xbf16>
    %cst_7 = arith.constant dense<0.000000e+00> : vector<256x128xf32>
    %19 = tpu.matmul %17, %18, %cst_7 {dimension_numbers = #tpu.dot_dimension_numbers<[1], [0], [0], [1], [0, 0, 1, 1], [], []>} : vector<256x32xbf16>, vector<32x128xbf16>, vector<256x128xf32> -> vector<256x128xf32>
    %c0_8 = arith.constant 0 : index
    %c0_9 = arith.constant 0 : index
    %20 = vector.load %arg3[%c0_8, %c0_9] : memref<1x128xf32, #tpu.memory_space<vmem>>, vector<1x128xf32>
    %21 = vector.broadcast %20 : vector<1x128xf32> to vector<256x128xf32>
    %22 = arith.addf %19, %21 : vector<256x128xf32>
    %23 = arith.truncf %22 : vector<256x128xf32> to vector<256x128xbf16>
    %c0_10 = arith.constant 0 : index
    %c0_11 = arith.constant 0 : index
    %24 = vector.load %arg4[%c0_10, %c0_11] : memref<256x128xbf16, #tpu.memory_space<vmem>>, vector<256x128xbf16>
    tpu.vector_store %arg4[%c0_10, %c0_11], %23 {strides = array<i32>} : memref<256x128xbf16, #tpu.memory_space<vmem>>, vector<256x128xbf16>,
    return
  }
  func.func @transform_0(%arg0: i32) -> (i32, i32) {
    %c0_i32 = arith.constant 0 : i32
    %c0_i32_0 = arith.constant 0 : i32
    return %arg0, %c0_i32 : i32, i32
  }
  func.func @transform_1(%arg0: i32) -> (i32, i32) {
    %c0_i32 = arith.constant 0 : i32
    %c0_i32_0 = arith.constant 0 : i32
    %c0_i32_1 = arith.constant 0 : i32
    return %c0_i32, %c0_i32_0 : i32, i32
  }
  func.func @transform_2(%arg0: i32) -> (i32, i32) {
    %c0_i32 = arith.constant 0 : i32
    %c0_i32_0 = arith.constant 0 : i32
    %c0_i32_1 = arith.constant 0 : i32
    return %c0_i32, %c0_i32_0 : i32, i32
  }
  func.func @transform_3(%arg0: i32) -> (i32, i32) {
    %c0_i32 = arith.constant 0 : i32
    %c0_i32_0 = arith.constant 0 : i32
    return %arg0, %c0_i32 : i32, i32
  }
}

</mosaic_0001>

<llo_original>
// kernel: tpu_custom_call.1
$region0: #{tpu_custom_call.1}
  #allocation0 [shape = 'u32[]', space=smem, size = 0x4, offset = 0x4, fixed_abs, tag = 'smem constant byte address 0x4 - core index']
  #allocation1 [shape = 'u32[144,128]{1,0:T(1,128)}', space=vmem, size = 0x12000, scoped, tag = 'internal scratch']
  %s0 = inlined_call_operand.vmem [shape: f32[256,32], index: 0, kind: input, shape index: {}]
  %s1 = inlined_call_operand.vmem [shape: bf16[32,128], index: 1, kind: input, shape index: {}]
  %s2 = inlined_call_operand.vmem [shape: f32[1,128], index: 2, kind: input, shape index: {}]
  %s3 = inlined_call_operand.hbm [shape: bf16[256,128], index: 3, kind: output, shape index: {}]
  %s4 = sld [smem:[#allocation0]]
  $region22: #{tpu_custom_call.1} parent=0
    _
  %s6 = ssub.s32 1, %s4
  %s7 = scalar_select 0, %s6, %s4
  $region1: #{tpu_custom_call.1} parent=0
    #allocation2 [shape = 'u8[65536]{0}', space=vmem, size = 0x10000, scoped, tag = 'output window, operand 0, single buffered']
    #allocation3 [shape = 's32[1]{0}', space=sflag, size = 0x4, scoped, tag = 'scoped memory for tpu_custom_call.1']
    %8 = vsyncpa [#allocation3], 0
    // Predicated region
    $region2: #{tpu_custom_call.1} parent=1 // pred_check
      _
    $region3: #{tpu_custom_call.1} parent=1 // pred_check_branch
      %10 = sbr.rel (0) target = $region5
    $region4: #{tpu_custom_call.1} parent=1 // pred_region
      _
    $region5: #{tpu_custom_call.1} parent=1 // pred_fallthru
      _
    // Predicated region
    $region6: #{tpu_custom_call.1} parent=1 // pred_check
      _
    $region7: #{tpu_custom_call.1} parent=1 // pred_check_branch
      %12 = sbr.rel (0) target = $region9
    $region8: #{tpu_custom_call.1} parent=1 // pred_region
      _
    $region9: #{tpu_custom_call.1} parent=1 // pred_fallthru
      _
    // Predicated region
    $region10: #{tpu_custom_call.1} parent=1 // pred_check
      _
    $region11: #{tpu_custom_call.1} parent=1 // pred_check_branch
      %14 = sbr.rel (0) target = $region13
    $region12: #{tpu_custom_call.1} parent=1 // pred_region
      _
    $region13: #{tpu_custom_call.1} parent=1 // pred_fallthru
      _
    %v16 = vld [vmem:[%s0] sm:$0xff]
    %v17 = vld [vmem:[%s0 + $0x8] sm:$0xff]
    %v18 = vld [vmem:[%s0 + $0x10] sm:$0xff]
    %v19 = vld [vmem:[%s0 + $0x18] sm:$0xff]
    %v20 = vld [vmem:[%s0 + $0x20] sm:$0xff]
    %v21 = vld [vmem:[%s0 + $0x28] sm:$0xff]
    %v22 = vld [vmem:[%s0 + $0x30] sm:$0xff]
    %v23 = vld [vmem:[%s0 + $0x38] sm:$0xff]
    %v24 = vld [vmem:[%s0 + $0x40] sm:$0xff]
    %v25 = vld [vmem:[%s0 + $0x48] sm:$0xff]
    %v26 = vld [vmem:[%s0 + $0x50] sm:$0xff]
    %v27 = vld [vmem:[%s0 + $0x58] sm:$0xff]
    %v28 = vld [vmem:[%s0 + $0x60] sm:$0xff]
    %v29 = vld [vmem:[%s0 + $0x68] sm:$0xff]
    %v30 = vld [vmem:[%s0 + $0x70] sm:$0xff]
    %v31 = vld [vmem:[%s0 + $0x78] sm:$0xff]
    %v32 = vld [vmem:[%s0 + $0x80] sm:$0xff]
    %v33 = vld [vmem:[%s0 + $0x88] sm:$0xff]
    %v34 = vld [vmem:[%s0 + $0x90] sm:$0xff]
    %v35 = vld [vmem:[%s0 + $0x98] sm:$0xff]
    %v36 = vld [vmem:[%s0 + $0xa0] sm:$0xff]
    %v37 = vld [vmem:[%s0 + $0xa8] sm:$0xff]
    %v38 = vld [vmem:[%s0 + $0xb0] sm:$0xff]
    %v39 = vld [vmem:[%s0 + $0xb8] sm:$0xff]
    %v40 = vld [vmem:[%s0 + $0xc0] sm:$0xff]
    %v41 = vld [vmem:[%s0 + $0xc8] sm:$0xff]
    %v42 = vld [vmem:[%s0 + $0xd0] sm:$0xff]
    %v43 = vld [vmem:[%s0 + $0xd8] sm:$0xff]
    %v44 = vld [vmem:[%s0 + $0xe0] sm:$0xff]
    %v45 = vld [vmem:[%s0 + $0xe8] sm:$0xff]
    %v46 = vld [vmem:[%s0 + $0xf0] sm:$0xff]
    %v47 = vld [vmem:[%s0 + $0xf8] sm:$0xff]
    %vm48 = vcmask 261120
    %v49 = vsel %vm48, %v16, 0.0
    %50 = vadd.xlane.f32.xlu0 %v49
    %v51 = vpop.xlane.xlu0 %50
    %v52 = vsel %vm48, %v17, 0.0
    %53 = vadd.xlane.f32.xlu0 %v52
    %v54 = vpop.xlane.xlu0 %53
    %v55 = vsel %vm48, %v18, 0.0
    %56 = vadd.xlane.f32.xlu0 %v55
    %v57 = vpop.xlane.xlu0 %56
    %v58 = vsel %vm48, %v19, 0.0
    %59 = vadd.xlane.f32.xlu0 %v58
    %v60 = vpop.xlane.xlu0 %59
    %v61 = vsel %vm48, %v20, 0.0
    %62 = vadd.xlane.f32.xlu0 %v61
    %v63 = vpop.xlane.xlu0 %62
    %v64 = vsel %vm48, %v21, 0.0
    %65 = vadd.xlane.f32.xlu0 %v64
    %v66 = vpop.xlane.xlu0 %65
    %v67 = vsel %vm48, %v22, 0.0
    %68 = vadd.xlane.f32.xlu0 %v67
    %v69 = vpop.xlane.xlu0 %68
    %v70 = vsel %vm48, %v23, 0.0
    %71 = vadd.xlane.f32.xlu0 %v70
    %v72 = vpop.xlane.xlu0 %71
    %v73 = vsel %vm48, %v24, 0.0
    %74 = vadd.xlane.f32.xlu0 %v73
    %v75 = vpop.xlane.xlu0 %74
    %v76 = vsel %vm48, %v25, 0.0
    %77 = vadd.xlane.f32.xlu0 %v76
    %v78 = vpop.xlane.xlu0 %77
    %v79 = vsel %vm48, %v26, 0.0
    %80 = vadd.xlane.f32.xlu0 %v79
    %v81 = vpop.xlane.xlu0 %80
    %v82 = vsel %vm48, %v27, 0.0
    %83 = vadd.xlane.f32.xlu0 %v82
    %v84 = vpop.xlane.xlu0 %83
    %v85 = vsel %vm48, %v28, 0.0
    %86 = vadd.xlane.f32.xlu0 %v85
    %v87 = vpop.xlane.xlu0 %86
    %v88 = vsel %vm48, %v29, 0.0
    %89 = vadd.xlane.f32.xlu0 %v88
    %v90 = vpop.xlane.xlu0 %89
    %v91 = vsel %vm48, %v30, 0.0
    %92 = vadd.xlane.f32.xlu0 %v91
    %v93 = vpop.xlane.xlu0 %92
    %v94 = vsel %vm48, %v31, 0.0
    %95 = vadd.xlane.f32.xlu0 %v94
    %v96 = vpop.xlane.xlu0 %95
    %v97 = vsel %vm48, %v32, 0.0
    %98 = vadd.xlane.f32.xlu0 %v97
    %v99 = vpop.xlane.xlu0 %98
    %v100 = vsel %vm48, %v33, 0.0
    %101 = vadd.xlane.f32.xlu0 %v100
    %v102 = vpop.xlane.xlu0 %101
    %v103 = vsel %vm48, %v34, 0.0
    %104 = vadd.xlane.f32.xlu0 %v103
    %v105 = vpop.xlane.xlu0 %104
    %v106 = vsel %vm48, %v35, 0.0
    %107 = vadd.xlane.f32.xlu0 %v106
    %v108 = vpop.xlane.xlu0 %107
    %v109 = vsel %vm48, %v36, 0.0
    %110 = vadd.xlane.f32.xlu0 %v109
    %v111 = vpop.xlane.xlu0 %110
    %v112 = vsel %vm48, %v37, 0.0
    %113 = vadd.xlane.f32.xlu0 %v112
    %v114 = vpop.xlane.xlu0 %113
    %v115 = vsel %vm48, %v38, 0.0
    %116 = vadd.xlane.f32.xlu0 %v115
    %v117 = vpop.xlane.xlu0 %116
    %v118 = vsel %vm48, %v39, 0.0
    %119 = vadd.xlane.f32.xlu0 %v118
    %v120 = vpop.xlane.xlu0 %119
    %v121 = vsel %vm48, %v40, 0.0
    %122 = vadd.xlane.f32.xlu0 %v121
    %v123 = vpop.xlane.xlu0 %122
    %v124 = vsel %vm48, %v41, 0.0
    %125 = vadd.xlane.f32.xlu0 %v124
    %v126 = vpop.xlane.xlu0 %125
    %v127 = vsel %vm48, %v42, 0.0
    %128 = vadd.xlane.f32.xlu0 %v127
    %v129 = vpop.xlane.xlu0 %128
    %v130 = vsel %vm48, %v43, 0.0
    %131 = vadd.xlane.f32.xlu0 %v130
    %v132 = vpop.xlane.xlu0 %131
    %v133 = vsel %vm48, %v44, 0.0
    %134 = vadd.xlane.f32.xlu0 %v133
    %v135 = vpop.xlane.xlu0 %134
    %v136 = vsel %vm48, %v45, 0.0
    %137 = vadd.xlane.f32.xlu0 %v136
    %v138 = vpop.xlane.xlu0 %137
    %v139 = vsel %vm48, %v46, 0.0
    %140 = vadd.xlane.f32.xlu0 %v139
    %v141 = vpop.xlane.xlu0 %140
    %v142 = vsel %vm48, %v47, 0.0
    %143 = vadd.xlane.f32.xlu0 %v142
    %v144 = vpop.xlane.xlu0 %143
    %v145 = vrcp.pop 32.0
    %v146 = vmul.f32 %v51, %v145
    %v147 = vmul.f32 %v54, %v145
    %v148 = vmul.f32 %v57, %v145
    %v149 = vmul.f32 %v60, %v145
    %v150 = vmul.f32 %v63, %v145
    %v151 = vmul.f32 %v66, %v145
    %v152 = vmul.f32 %v69, %v145
    %v153 = vmul.f32 %v72, %v145
    %v154 = vmul.f32 %v75, %v145
    %v155 = vmul.f32 %v78, %v145
    %v156 = vmul.f32 %v81, %v145
    %v157 = vmul.f32 %v84, %v145
    %v158 = vmul.f32 %v87, %v145
    %v159 = vmul.f32 %v90, %v145
    %v160 = vmul.f32 %v93, %v145
    %v161 = vmul.f32 %v96, %v145
    %v162 = vmul.f32 %v99, %v145
    %v163 = vmul.f32 %v102, %v145
    %v164 = vmul.f32 %v105, %v145
    %v165 = vmul.f32 %v108, %v145
    %v166 = vmul.f32 %v111, %v145
    %v167 = vmul.f32 %v114, %v145
    %v168 = vmul.f32 %v117, %v145
    %v169 = vmul.f32 %v120, %v145
    %v170 = vmul.f32 %v123, %v145
    %v171 = vmul.f32 %v126, %v145
    %v172 = vmul.f32 %v129, %v145
    %v173 = vmul.f32 %v132, %v145
    %v174 = vmul.f32 %v135, %v145
    %v175 = vmul.f32 %v138, %v145
    %v176 = vmul.f32 %v141, %v145
    %v177 = vmul.f32 %v144, %v145
    %v178 = vsub.f32 %v16, %v146
    %v179 = vsub.f32 %v17, %v147
    %v180 = vsub.f32 %v18, %v148
    %v181 = vsub.f32 %v19, %v149
    %v182 = vsub.f32 %v20, %v150
    %v183 = vsub.f32 %v21, %v151
    %v184 = vsub.f32 %v22, %v152
    %v185 = vsub.f32 %v23, %v153
    %v186 = vsub.f32 %v24, %v154
    %v187 = vsub.f32 %v25, %v155
    %v188 = vsub.f32 %v26, %v156
    %v189 = vsub.f32 %v27, %v157
    %v190 = vsub.f32 %v28, %v158
    %v191 = vsub.f32 %v29, %v159
    %v192 = vsub.f32 %v30, %v160
    %v193 = vsub.f32 %v31, %v161
    %v194 = vsub.f32 %v32, %v162
    %v195 = vsub.f32 %v33, %v163
    %v196 = vsub.f32 %v34, %v164
    %v197 = vsub.f32 %v35, %v165
    %v198 = vsub.f32 %v36, %v166
    %v199 = vsub.f32 %v37, %v167
    %v200 = vsub.f32 %v38, %v168
    %v201 = vsub.f32 %v39, %v169
    %v202 = vsub.f32 %v40, %v170
    %v203 = vsub.f32 %v41, %v171
    %v204 = vsub.f32 %v42, %v172
    %v205 = vsub.f32 %v43, %v173
    %v206 = vsub.f32 %v44, %v174
    %v207 = vsub.f32 %v45, %v175
    %v208 = vsub.f32 %v46, %v176
    %v209 = vsub.f32 %v47, %v177
    %v210 = vmul.f32 %v178, %v178
    %v211 = vmul.f32 %v179, %v179
    %v212 = vmul.f32 %v180, %v180
    %v213 = vmul.f32 %v181, %v181
    %v214 = vmul.f32 %v182, %v182
    %v215 = vmul.f32 %v183, %v183
    %v216 = vmul.f32 %v184, %v184
    %v217 = vmul.f32 %v185, %v185
    %v218 = vmul.f32 %v186, %v186
    %v219 = vmul.f32 %v187, %v187
    %v220 = vmul.f32 %v188, %v188
    %v221 = vmul.f32 %v189, %v189
    %v222 = vmul.f32 %v190, %v190
    %v223 = vmul.f32 %v191, %v191
    %v224 = vmul.f32 %v192, %v192
    %v225 = vmul.f32 %v193, %v193
    %v226 = vmul.f32 %v194, %v194
    %v227 = vmul.f32 %v195, %v195
    %v228 = vmul.f32 %v196, %v196
    %v229 = vmul.f32 %v197, %v197
    %v230 = vmul.f32 %v198, %v198
    %v231 = vmul.f32 %v199, %v199
    %v232 = vmul.f32 %v200, %v200
    %v233 = vmul.f32 %v201, %v201
    %v234 = vmul.f32 %v202, %v202
    %v235 = vmul.f32 %v203, %v203
    %v236 = vmul.f32 %v204, %v204
    %v237 = vmul.f32 %v205, %v205
    %v238 = vmul.f32 %v206, %v206
    %v239 = vmul.f32 %v207, %v207
    %v240 = vmul.f32 %v208, %v208
    %v241 = vmul.f32 %v209, %v209
    %v242 = vsel %vm48, %v210, 0.0
    %243 = vadd.xlane.f32.xlu0 %v242
    %v244 = vpop.xlane.xlu0 %243
    %v245 = vsel %vm48, %v211, 0.0
    %246 = vadd.xlane.f32.xlu0 %v245
    %v247 = vpop.xlane.xlu0 %246
    %v248 = vsel %vm48, %v212, 0.0
    %249 = vadd.xlane.f32.xlu0 %v248
    %v250 = vpop.xlane.xlu0 %249
    %v251 = vsel %vm48, %v213, 0.0
    %252 = vadd.xlane.f32.xlu0 %v251
    %v253 = vpop.xlane.xlu0 %252
    %v254 = vsel %vm48, %v214, 0.0
    %255 = vadd.xlane.f32.xlu0 %v254
    %v256 = vpop.xlane.xlu0 %255
    %v257 = vsel %vm48, %v215, 0.0
    %258 = vadd.xlane.f32.xlu0 %v257
    %v259 = vpop.xlane.xlu0 %258
    %v260 = vsel %vm48, %v216, 0.0
    %261 = vadd.xlane.f32.xlu0 %v260
    %v262 = vpop.xlane.xlu0 %261
    %v263 = vsel %vm48, %v217, 0.0
    %264 = vadd.xlane.f32.xlu0 %v263
    %v265 = vpop.xlane.xlu0 %264
    %v266 = vsel %vm48, %v218, 0.0
    %267 = vadd.xlane.f32.xlu0 %v266
    %v268 = vpop.xlane.xlu0 %267
    %v269 = vsel %vm48, %v219, 0.0
    %270 = vadd.xlane.f32.xlu0 %v269
    %v271 = vpop.xlane.xlu0 %270
    %v272 = vsel %vm48, %v220, 0.0
    %273 = vadd.xlane.f32.xlu0 %v272
    %v274 = vpop.xlane.xlu0 %273
    %v275 = vsel %vm48, %v221, 0.0
    %276 = vadd.xlane.f32.xlu0 %v275
    %v277 = vpop.xlane.xlu0 %276
    %v278 = vsel %vm48, %v222, 0.0
    %279 = vadd.xlane.f32.xlu0 %v278
    %v280 = vpop.xlane.xlu0 %279
    %v281 = vsel %vm48, %v223, 0.0
    %282 = vadd.xlane.f32.xlu0 %v281
    %v283 = vpop.xlane.xlu0 %282
    %v284 = vsel %vm48, %v224, 0.0
    %285 = vadd.xlane.f32.xlu0 %v284
    %v286 = vpop.xlane.xlu0 %285
    %v287 = vsel %vm48, %v225, 0.0
    %288 = vadd.xlane.f32.xlu0 %v287
    %v289 = vpop.xlane.xlu0 %288
    %v290 = vsel %vm48, %v226, 0.0
    %291 = vadd.xlane.f32.xlu0 %v290
    %v292 = vpop.xlane.xlu0 %291
    %v293 = vsel %vm48, %v227, 0.0
    %294 = vadd.xlane.f32.xlu0 %v293
    %v295 = vpop.xlane.xlu0 %294
    %v296 = vsel %vm48, %v228, 0.0
    %297 = vadd.xlane.f32.xlu0 %v296
    %v298 = vpop.xlane.xlu0 %297
    %v299 = vsel %vm48, %v229, 0.0
    %300 = vadd.xlane.f32.xlu0 %v299
    %v301 = vpop.xlane.xlu0 %300
    %v302 = vsel %vm48, %v230, 0.0
    %303 = vadd.xlane.f32.xlu0 %v302
    %v304 = vpop.xlane.xlu0 %303
    %v305 = vsel %vm48, %v231, 0.0
    %306 = vadd.xlane.f32.xlu0 %v305
    %v307 = vpop.xlane.xlu0 %306
    %v308 = vsel %vm48, %v232, 0.0
    %309 = vadd.xlane.f32.xlu0 %v308
    %v310 = vpop.xlane.xlu0 %309
    %v311 = vsel %vm48, %v233, 0.0
    %312 = vadd.xlane.f32.xlu0 %v311
    %v313 = vpop.xlane.xlu0 %312
    %v314 = vsel %vm48, %v234, 0.0
    %315 = vadd.xlane.f32.xlu0 %v314
    %v316 = vpop.xlane.xlu0 %315
    %v317 = vsel %vm48, %v235, 0.0
    %318 = vadd.xlane.f32.xlu0 %v317
    %v319 = vpop.xlane.xlu0 %318
    %v320 = vsel %vm48, %v236, 0.0
    %321 = vadd.xlane.f32.xlu0 %v320
    %v322 = vpop.xlane.xlu0 %321
    %v323 = vsel %vm48, %v237, 0.0
    %324 = vadd.xlane.f32.xlu0 %v323
    %v325 = vpop.xlane.xlu0 %324
    %v326 = vsel %vm48, %v238, 0.0
    %327 = vadd.xlane.f32.xlu0 %v326
    %v328 = vpop.xlane.xlu0 %327
    %v329 = vsel %vm48, %v239, 0.0
    %330 = vadd.xlane.f32.xlu0 %v329
    %v331 = vpop.xlane.xlu0 %330
    %v332 = vsel %vm48, %v240, 0.0
    %333 = vadd.xlane.f32.xlu0 %v332
    %v334 = vpop.xlane.xlu0 %333
    %v335 = vsel %vm48, %v241, 0.0
    %336 = vadd.xlane.f32.xlu0 %v335
    %v337 = vpop.xlane.xlu0 %336
    %v338 = vmul.f32 %v244, %v145
    %v339 = vmul.f32 %v247, %v145
    %v340 = vmul.f32 %v250, %v145
    %v341 = vmul.f32 %v253, %v145
    %v342 = vmul.f32 %v256, %v145
    %v343 = vmul.f32 %v259, %v145
    %v344 = vmul.f32 %v262, %v145
    %v345 = vmul.f32 %v265, %v145
    %v346 = vmul.f32 %v268, %v145
    %v347 = vmul.f32 %v271, %v145
    %v348 = vmul.f32 %v274, %v145
    %v349 = vmul.f32 %v277, %v145
    %v350 = vmul.f32 %v280, %v145
    %v351 = vmul.f32 %v283, %v145
    %v352 = vmul.f32 %v286, %v145
    %v353 = vmul.f32 %v289, %v145
    %v354 = vmul.f32 %v292, %v145
    %v355 = vmul.f32 %v295, %v145
    %v356 = vmul.f32 %v298, %v145
    %v357 = vmul.f32 %v301, %v145
    %v358 = vmul.f32 %v304, %v145
    %v359 = vmul.f32 %v307, %v145
    %v360 = vmul.f32 %v310, %v145
    %v361 = vmul.f32 %v313, %v145
    %v362 = vmul.f32 %v316, %v145
    %v363 = vmul.f32 %v319, %v145
    %v364 = vmul.f32 %v322, %v145
    %v365 = vmul.f32 %v325, %v145
    %v366 = vmul.f32 %v328, %v145
    %v367 = vmul.f32 %v331, %v145
    %v368 = vmul.f32 %v334, %v145
    %v369 = vmul.f32 %v337, %v145
    %v370 = vadd.f32 %v338, 1e-05
    %v371 = vadd.f32 %v339, 1e-05
    %v372 = vadd.f32 %v340, 1e-05
    %v373 = vadd.f32 %v341, 1e-05
    %v374 = vadd.f32 %v342, 1e-05
    %v375 = vadd.f32 %v343, 1e-05
    %v376 = vadd.f32 %v344, 1e-05
    %v377 = vadd.f32 %v345, 1e-05
    %v378 = vadd.f32 %v346, 1e-05
    %v379 = vadd.f32 %v347, 1e-05
    %v380 = vadd.f32 %v348, 1e-05
    %v381 = vadd.f32 %v349, 1e-05
    %v382 = vadd.f32 %v350, 1e-05
    %v383 = vadd.f32 %v351, 1e-05
    %v384 = vadd.f32 %v352, 1e-05
    %v385 = vadd.f32 %v353, 1e-05
    %v386 = vadd.f32 %v354, 1e-05
    %v387 = vadd.f32 %v355, 1e-05
    %v388 = vadd.f32 %v356, 1e-05
    %v389 = vadd.f32 %v357, 1e-05
    %v390 = vadd.f32 %v358, 1e-05
    %v391 = vadd.f32 %v359, 1e-05
    %v392 = vadd.f32 %v360, 1e-05
    %v393 = vadd.f32 %v361, 1e-05
    %v394 = vadd.f32 %v362, 1e-05
    %v395 = vadd.f32 %v363, 1e-05
    %v396 = vadd.f32 %v364, 1e-05
    %v397 = vadd.f32 %v365, 1e-05
    %v398 = vadd.f32 %v366, 1e-05
    %v399 = vadd.f32 %v367, 1e-05
    %v400 = vadd.f32 %v368, 1e-05
    %v401 = vadd.f32 %v369, 1e-05
    %v402 = vrsqrt.pop %v370
    %v403 = vrsqrt.pop %v371
    %v404 = vrsqrt.pop %v372
    %v405 = vrsqrt.pop %v373
    %v406 = vrsqrt.pop %v374
    %v407 = vrsqrt.pop %v375
    %v408 = vrsqrt.pop %v376
    %v409 = vrsqrt.pop %v377
    %v410 = vrsqrt.pop %v378
    %v411 = vrsqrt.pop %v379
    %v412 = vrsqrt.pop %v380
    %v413 = vrsqrt.pop %v381
    %v414 = vrsqrt.pop %v382
    %v415 = vrsqrt.pop %v383
    %v416 = vrsqrt.pop %v384
    %v417 = vrsqrt.pop %v385
    %v418 = vrsqrt.pop %v386
    %v419 = vrsqrt.pop %v387
    %v420 = vrsqrt.pop %v388
    %v421 = vrsqrt.pop %v389
    %v422 = vrsqrt.pop %v390
    %v423 = vrsqrt.pop %v391
    %v424 = vrsqrt.pop %v392
    %v425 = vrsqrt.pop %v393
    %v426 = vrsqrt.pop %v394
    %v427 = vrsqrt.pop %v395
    %v428 = vrsqrt.pop %v396
    %v429 = vrsqrt.pop %v397
    %v430 = vrsqrt.pop %v398
    %v431 = vrsqrt.pop %v399
    %v432 = vrsqrt.pop %v400
    %v433 = vrsqrt.pop %v401
    %v434 = vmul.f32 %v178, %v402
    %v435 = vmul.f32 %v179, %v403
    %v436 = vmul.f32 %v180, %v404
    %v437 = vmul.f32 %v181, %v405
    %v438 = vmul.f32 %v182, %v406
    %v439 = vmul.f32 %v183, %v407
    %v440 = vmul.f32 %v184, %v408
    %v441 = vmul.f32 %v185, %v409
    %v442 = vmul.f32 %v186, %v410
    %v443 = vmul.f32 %v187, %v411
    %v444 = vmul.f32 %v188, %v412
    %v445 = vmul.f32 %v189, %v413
    %v446 = vmul.f32 %v190, %v414
    %v447 = vmul.f32 %v191, %v415
    %v448 = vmul.f32 %v192, %v416
    %v449 = vmul.f32 %v193, %v417
    %v450 = vmul.f32 %v194, %v418
    %v451 = vmul.f32 %v195, %v419
    %v452 = vmul.f32 %v196, %v420
    %v453 = vmul.f32 %v197, %v421
    %v454 = vmul.f32 %v198, %v422
    %v455 = vmul.f32 %v199, %v423
    %v456 = vmul.f32 %v200, %v424
    %v457 = vmul.f32 %v201, %v425
    %v458 = vmul.f32 %v202, %v426
    %v459 = vmul.f32 %v203, %v427
    %v460 = vmul.f32 %v204, %v428
    %v461 = vmul.f32 %v205, %v429
    %v462 = vmul.f32 %v206, %v430
    %v463 = vmul.f32 %v207, %v431
    %v464 = vmul.f32 %v208, %v432
    %v465 = vmul.f32 %v209, %v433
    %v466 = vpack.c.bf16 %v435, %v434
    %v467 = vpack.c.bf16 %v437, %v436
    %v468 = vpack.c.bf16 %v439, %v438
    %v469 = vpack.c.bf16 %v441, %v440
    %v470 = vpack.c.bf16 %v443, %v442
    %v471 = vpack.c.bf16 %v445, %v444
    %v472 = vpack.c.bf16 %v447, %v446
    %v473 = vpack.c.bf16 %v449, %v448
    %v474 = vpack.c.bf16 %v451, %v450
    %v475 = vpack.c.bf16 %v453, %v452
    %v476 = vpack.c.bf16 %v455, %v454
    %v477 = vpack.c.bf16 %v457, %v456
    %v478 = vpack.c.bf16 %v459, %v458
    %v479 = vpack.c.bf16 %v461, %v460
    %v480 = vpack.c.bf16 %v463, %v462
    %v481 = vpack.c.bf16 %v465, %v464
    %v482 = vld [vmem:[%s1] sm:$0xf]
    %v483 = vld [vmem:[%s1 + $0x4] sm:$0xf]
    %v484 = vld [vmem:[%s1 + $0x8] sm:$0xf]
    %v485 = vld [vmem:[%s1 + $0xc] sm:$0xf]
    %v486 = vld [vmem:[%s2] sm:$0x1]
    %v488 = vlaneseq
    %v489 = vshrl.u32 %v488, 7
    %v490 = vsub.s32 0, %v489
    %v491 = vrot.slane %v486, %v490
    %v497 = vunpack.c.l.b16 %v482
    %v498 = vunpack.c.l.b16 %v483
    %v499 = vunpack.c.l.b16 %v484
    %v500 = vunpack.c.l.b16 %v485
    %v501 = vpack.c.b16 %v498, %v497
    %v502 = vpack.c.b16 %v500, %v499
    %v506 = vsel %vm48, %v466, 0
    %v509 = vsel %vm48, %v467, 0
    %v512 = vsel %vm48, %v468, 0
    %v515 = vsel %vm48, %v469, 0
    %v518 = vsel %vm48, %v470, 0
    %v521 = vsel %vm48, %v471, 0
    %v524 = vsel %vm48, %v472, 0
    %v527 = vsel %vm48, %v473, 0
    %v530 = vsel %vm48, %v474, 0
    %v533 = vsel %vm48, %v475, 0
    %v536 = vsel %vm48, %v476, 0
    %v539 = vsel %vm48, %v477, 0
    %v542 = vsel %vm48, %v478, 0
    %v545 = vsel %vm48, %v479, 0
    %v548 = vsel %vm48, %v480, 0
    %v551 = vsel %vm48, %v481, 0
    %553 = vmatprep.subr.bf16.mxu0 0
    %554 = vmatpush1.bf16.msra.mxu0 %v501
    %555 = vmatprep.subr.bf16.mxu0 0
    %556 = vmatpush1.bf16.msra.mxu0 %v502
    %557 = vmatprep.subr.bf16.mxu0 0
    %558 = vmatpush1.bf16.msra.mxu0 0
    %559 = vmatprep.subr.bf16.mxu0 0
    %560 = vmatpush1.bf16.msra.mxu0 0
    %561 = vmatprep.subr.bf16.mxu0 0
    %562 = vmatpush1.bf16.msra.mxu0 0
    %563 = vmatprep.subr.bf16.mxu0 0
    %564 = vmatpush1.bf16.msra.mxu0 0
    %565 = vmatprep.subr.bf16.mxu0 0
    %566 = vmatpush1.bf16.msra.mxu0 0
    %567 = vmatprep.subr.bf16.mxu0 0
    %568 = vmatpush1.bf16.msra.mxu0 0
    %569 = vmatprep.subr.bf16.mxu0 0
    %570 = vmatpush1.bf16.msra.mxu0 0
    %571 = vmatprep.subr.bf16.mxu0 0
    %572 = vmatpush1.bf16.msra.mxu0 0
    %573 = vmatprep.subr.bf16.mxu0 0
    %574 = vmatpush1.bf16.msra.mxu0 0
    %575 = vmatprep.subr.bf16.mxu0 0
    %576 = vmatpush1.bf16.msra.mxu0 0
    %577 = vmatprep.subr.bf16.mxu0 0
    %578 = vmatpush1.bf16.msra.mxu0 0
    %579 = vmatprep.subr.bf16.mxu0 0
    %580 = vmatpush1.bf16.msra.mxu0 0
    %581 = vmatprep.subr.bf16.mxu0 0
    %582 = vmatpush1.bf16.msra.mxu0 0
    %583 = vmatprep.subr.bf16.mxu0 0
    %584 = vmatpush1.bf16.msra.mxu0 0
    %585 = vmatprep.mubr.bf16.mxu0 0
    %586 = vmatmul.mubr.bf16.gmra.mrb[0].mxu0 %v506
    %v587 = vpop.f32.mrb[0].mxu0
    %v588 = vadd.f32 %v491, %v587
    %v589 = vpop.f32.mrb[0].mxu0
    %v590 = vpop.f32.mrb[0].mxu0
    %v591 = vadd.f32 %v491, %v590
    %v592 = vpop.f32.mrb[0].mxu0
    %593 = vmatprep.mubr.bf16.mxu0 0
    %594 = vmatmul.mubr.bf16.gmra.mrb[0].mxu0 %v509
    %v595 = vpop.f32.mrb[0].mxu0
    %v596 = vadd.f32 %v491, %v595
    %v597 = vpop.f32.mrb[0].mxu0
    %v598 = vpop.f32.mrb[0].mxu0
    %v599 = vadd.f32 %v491, %v598
    %v600 = vpop.f32.mrb[0].mxu0
    %601 = vmatprep.mubr.bf16.mxu0 0
    %602 = vmatmul.mubr.bf16.gmra.mrb[0].mxu0 %v512
    %v603 = vpop.f32.mrb[0].mxu0
    %v604 = vadd.f32 %v491, %v603
    %v605 = vpop.f32.mrb[0].mxu0
    %v606 = vpop.f32.mrb[0].mxu0
    %v607 = vadd.f32 %v491, %v606
    %v608 = vpop.f32.mrb[0].mxu0
    %609 = vmatprep.mubr.bf16.mxu0 0
    %610 = vmatmul.mubr.bf16.gmra.mrb[0].mxu0 %v515
    %v611 = vpop.f32.mrb[0].mxu0
    %v612 = vadd.f32 %v491, %v611
    %v613 = vpop.f32.mrb[0].mxu0
    %v614 = vpop.f32.mrb[0].mxu0
    %v615 = vadd.f32 %v491, %v614
    %v616 = vpop.f32.mrb[0].mxu0
    %617 = vmatprep.mubr.bf16.mxu0 0
    %618 = vmatmul.mubr.bf16.gmra.mrb[0].mxu0 %v518
    %v619 = vpop.f32.mrb[0].mxu0
    %v620 = vadd.f32 %v491, %v619
    %v621 = vpop.f32.mrb[0].mxu0
    %v622 = vpop.f32.mrb[0].mxu0
    %v623 = vadd.f32 %v491, %v622
    %v624 = vpop.f32.mrb[0].mxu0
    %625 = vmatprep.mubr.bf16.mxu0 0
    %626 = vmatmul.mubr.bf16.gmra.mrb[0].mxu0 %v521
    %v627 = vpop.f32.mrb[0].mxu0
    %v628 = vadd.f32 %v491, %v627
    %v629 = vpop.f32.mrb[0].mxu0
    %v630 = vpop.f32.mrb[0].mxu0
    %v631 = vadd.f32 %v491, %v630
    %v632 = vpop.f32.mrb[0].mxu0
    %633 = vmatprep.mubr.bf16.mxu0 0
    %634 = vmatmul.mubr.bf16.gmra.mrb[0].mxu0 %v524
    %v635 = vpop.f32.mrb[0].mxu0
    %v636 = vadd.f32 %v491, %v635
    %v637 = vpop.f32.mrb[0].mxu0
    %v638 = vpop.f32.mrb[0].mxu0
    %v639 = vadd.f32 %v491, %v638
    %v640 = vpop.f32.mrb[0].mxu0
    %641 = vmatprep.mubr.bf16.mxu0 0
    %642 = vmatmul.mubr.bf16.gmra.mrb[0].mxu0 %v527
    %v643 = vpop.f32.mrb[0].mxu0
    %v644 = vadd.f32 %v491, %v643
    %v645 = vpop.f32.mrb[0].mxu0
    %v646 = vpop.f32.mrb[0].mxu0
    %v647 = vadd.f32 %v491, %v646
    %v648 = vpop.f32.mrb[0].mxu0
    %649 = vmatprep.mubr.bf16.mxu0 0
    %650 = vmatmul.mubr.bf16.gmra.mrb[0].mxu0 %v530
    %v651 = vpop.f32.mrb[0].mxu0
    %v652 = vadd.f32 %v491, %v651
    %v653 = vpop.f32.mrb[0].mxu0
    %v654 = vpop.f32.mrb[0].mxu0
    %v655 = vadd.f32 %v491, %v654
    %v656 = vpop.f32.mrb[0].mxu0
    %657 = vmatprep.mubr.bf16.mxu0 0
    %658 = vmatmul.mubr.bf16.gmra.mrb[0].mxu0 %v533
    %v659 = vpop.f32.mrb[0].mxu0
    %v660 = vadd.f32 %v491, %v659
    %v661 = vpop.f32.mrb[0].mxu0
    %v662 = vpop.f32.mrb[0].mxu0
    %v663 = vadd.f32 %v491, %v662
    %v664 = vpop.f32.mrb[0].mxu0
    %665 = vmatprep.mubr.bf16.mxu0 0
    %666 = vmatmul.mubr.bf16.gmra.mrb[0].mxu0 %v536
    %v667 = vpop.f32.mrb[0].mxu0
    %v668 = vadd.f32 %v491, %v667
    %v669 = vpop.f32.mrb[0].mxu0
    %v670 = vpop.f32.mrb[0].mxu0
    %v671 = vadd.f32 %v491, %v670
    %v672 = vpop.f32.mrb[0].mxu0
    %673 = vmatprep.mubr.bf16.mxu0 0
    %674 = vmatmul.mubr.bf16.gmra.mrb[0].mxu0 %v539
    %v675 = vpop.f32.mrb[0].mxu0
    %v676 = vadd.f32 %v491, %v675
    %v677 = vpop.f32.mrb[0].mxu0
    %v678 = vpop.f32.mrb[0].mxu0
    %v679 = vadd.f32 %v491, %v678
    %v680 = vpop.f32.mrb[0].mxu0
    %681 = vmatprep.mubr.bf16.mxu0 0
    %682 = vmatmul.mubr.bf16.gmra.mrb[0].mxu0 %v542
    %v683 = vpop.f32.mrb[0].mxu0
    %v684 = vadd.f32 %v491, %v683
    %v685 = vpop.f32.mrb[0].mxu0
    %v686 = vpop.f32.mrb[0].mxu0
    %v687 = vadd.f32 %v491, %v686
    %v688 = vpop.f32.mrb[0].mxu0
    %689 = vmatprep.mubr.bf16.mxu0 0
    %690 = vmatmul.mubr.bf16.gmra.mrb[0].mxu0 %v545
    %v691 = vpop.f32.mrb[0].mxu0
    %v692 = vadd.f32 %v491, %v691
    %v693 = vpop.f32.mrb[0].mxu0
    %v694 = vpop.f32.mrb[0].mxu0
    %v695 = vadd.f32 %v491, %v694
    %v696 = vpop.f32.mrb[0].mxu0
    %697 = vmatprep.mubr.bf16.mxu0 0
    %698 = vmatmul.mubr.bf16.gmra.mrb[0].mxu0 %v548
    %v699 = vpop.f32.mrb[0].mxu0
    %v700 = vadd.f32 %v491, %v699
    %v701 = vpop.f32.mrb[0].mxu0
    %v702 = vpop.f32.mrb[0].mxu0
    %v703 = vadd.f32 %v491, %v702
    %v704 = vpop.f32.mrb[0].mxu0
    %705 = vmatprep.mubr.bf16.mxu0 0
    %706 = vmatmul.mubr.bf16.gmra.mrb[0].mxu0 %v551
    %v707 = vpop.f32.mrb[0].mxu0
    %v708 = vadd.f32 %v491, %v707
    %v709 = vpop.f32.mrb[0].mxu0
    %v710 = vpop.f32.mrb[0].mxu0
    %v711 = vadd.f32 %v491, %v710
    %v712 = vpop.f32.mrb[0].mxu0
    %713 = vdwg.mxu0
    %v714 = vpack.c.bf16 %v591, %v588
    %v715 = vpack.c.bf16 %v599, %v596
    %v716 = vpack.c.bf16 %v607, %v604
    %v717 = vpack.c.bf16 %v615, %v612
    %v718 = vpack.c.bf16 %v623, %v620
    %v719 = vpack.c.bf16 %v631, %v628
    %v720 = vpack.c.bf16 %v639, %v636
    %v721 = vpack.c.bf16 %v647, %v644
    %v722 = vpack.c.bf16 %v655, %v652
    %v723 = vpack.c.bf16 %v663, %v660
    %v724 = vpack.c.bf16 %v671, %v668
    %v725 = vpack.c.bf16 %v679, %v676
    %v726 = vpack.c.bf16 %v687, %v684
    %v727 = vpack.c.bf16 %v695, %v692
    %v728 = vpack.c.bf16 %v703, %v700
    %v729 = vpack.c.bf16 %v711, %v708
    %v746 = vunpack.c.l.b16 %v714
    %v747 = vunpack.c.h.b16 %v714
    %v748 = vunpack.c.l.b16 %v715
    %v749 = vunpack.c.h.b16 %v715
    %v750 = vunpack.c.l.b16 %v716
    %v751 = vunpack.c.h.b16 %v716
    %v752 = vunpack.c.l.b16 %v717
    %v753 = vunpack.c.h.b16 %v717
    %v754 = vunpack.c.l.b16 %v718
    %v755 = vunpack.c.h.b16 %v718
    %v756 = vunpack.c.l.b16 %v719
    %v757 = vunpack.c.h.b16 %v719
    %v758 = vunpack.c.l.b16 %v720
    %v759 = vunpack.c.h.b16 %v720
    %v760 = vunpack.c.l.b16 %v721
    %v761 = vunpack.c.h.b16 %v721
    %v762 = vunpack.c.l.b16 %v722
    %v763 = vunpack.c.h.b16 %v722
    %v764 = vunpack.c.l.b16 %v723
    %v765 = vunpack.c.h.b16 %v723
    %v766 = vunpack.c.l.b16 %v724
    %v767 = vunpack.c.h.b16 %v724
    %v768 = vunpack.c.l.b16 %v725
    %v769 = vunpack.c.h.b16 %v725
    %v770 = vunpack.c.l.b16 %v726
    %v771 = vunpack.c.h.b16 %v726
    %v772 = vunpack.c.l.b16 %v727
    %v773 = vunpack.c.h.b16 %v727
    %v774 = vunpack.c.l.b16 %v728
    %v775 = vunpack.c.h.b16 %v728
    %v776 = vunpack.c.l.b16 %v729
    %v777 = vunpack.c.h.b16 %v729
    %v778 = vpack.c.b16 %v746, %v746
    %v779 = vpack.c.b16 %v747, %v747
    %v780 = vpack.c.b16 %v748, %v748
    %v781 = vpack.c.b16 %v749, %v749
    %v782 = vpack.c.b16 %v750, %v750
    %v783 = vpack.c.b16 %v751, %v751
    %v784 = vpack.c.b16 %v752, %v752
    %v785 = vpack.c.b16 %v753, %v753
    %v786 = vpack.c.b16 %v754, %v754
    %v787 = vpack.c.b16 %v755, %v755
    %v788 = vpack.c.b16 %v756, %v756
    %v789 = vpack.c.b16 %v757, %v757
    %v790 = vpack.c.b16 %v758, %v758
    %v791 = vpack.c.b16 %v759, %v759
    %v792 = vpack.c.b16 %v760, %v760
    %v793 = vpack.c.b16 %v761, %v761
    %v794 = vpack.c.b16 %v762, %v762
    %v795 = vpack.c.b16 %v763, %v763
    %v796 = vpack.c.b16 %v764, %v764
    %v797 = vpack.c.b16 %v765, %v765
    %v798 = vpack.c.b16 %v766, %v766
    %v799 = vpack.c.b16 %v767, %v767
    %v800 = vpack.c.b16 %v768, %v768
    %v801 = vpack.c.b16 %v769, %v769
    %v802 = vpack.c.b16 %v770, %v770
    %v803 = vpack.c.b16 %v771, %v771
    %v804 = vpack.c.b16 %v772, %v772
    %v805 = vpack.c.b16 %v773, %v773
    %v806 = vpack.c.b16 %v774, %v774
    %v807 = vpack.c.b16 %v775, %v775
    %v808 = vpack.c.b16 %v776, %v776
    %v809 = vpack.c.b16 %v777, %v777
    %842 = vst [vmem:[#allocation2] sm:$0xf] %v778
    %843 = vst [vmem:[#allocation2 + $0x4] sm:$0xf] %v779
    %844 = vst [vmem:[#allocation2 + $0x8] sm:$0xf] %v780
    %845 = vst [vmem:[#allocation2 + $0xc] sm:$0xf] %v781
    %846 = vst [vmem:[#allocation2 + $0x10] sm:$0xf] %v782
    %847 = vst [vmem:[#allocation2 + $0x14] sm:$0xf] %v783
    %848 = vst [vmem:[#allocation2 + $0x18] sm:$0xf] %v784
    %849 = vst [vmem:[#allocation2 + $0x1c] sm:$0xf] %v785
    %850 = vst [vmem:[#allocation2 + $0x20] sm:$0xf] %v786
    %851 = vst [vmem:[#allocation2 + $0x24] sm:$0xf] %v787
    %852 = vst [vmem:[#allocation2 + $0x28] sm:$0xf] %v788
    %853 = vst [vmem:[#allocation2 + $0x2c] sm:$0xf] %v789
    %854 = vst [vmem:[#allocation2 + $0x30] sm:$0xf] %v790
    %855 = vst [vmem:[#allocation2 + $0x34] sm:$0xf] %v791
    %856 = vst [vmem:[#allocation2 + $0x38] sm:$0xf] %v792
    %857 = vst [vmem:[#allocation2 + $0x3c] sm:$0xf] %v793
    %858 = vst [vmem:[#allocation2 + $0x40] sm:$0xf] %v794
    %859 = vst [vmem:[#allocation2 + $0x44] sm:$0xf] %v795
    %860 = vst [vmem:[#allocation2 + $0x48] sm:$0xf] %v796
    %861 = vst [vmem:[#allocation2 + $0x4c] sm:$0xf] %v797
    %862 = vst [vmem:[#allocation2 + $0x50] sm:$0xf] %v798
    %863 = vst [vmem:[#allocation2 + $0x54] sm:$0xf] %v799
    %864 = vst [vmem:[#allocation2 + $0x58] sm:$0xf] %v800
    %865 = vst [vmem:[#allocation2 + $0x5c] sm:$0xf] %v801
    %866 = vst [vmem:[#allocation2 + $0x60] sm:$0xf] %v802
    %867 = vst [vmem:[#allocation2 + $0x64] sm:$0xf] %v803
    %868 = vst [vmem:[#allocation2 + $0x68] sm:$0xf] %v804
    %869 = vst [vmem:[#allocation2 + $0x6c] sm:$0xf] %v805
    %870 = vst [vmem:[#allocation2 + $0x70] sm:$0xf] %v806
    %871 = vst [vmem:[#allocation2 + $0x74] sm:$0xf] %v807
    %872 = vst [vmem:[#allocation2 + $0x78] sm:$0xf] %v808
    %873 = vst [vmem:[#allocation2 + $0x7c] sm:$0xf] %v809
    // Predicated region
    $region14: #{tpu_custom_call.1} parent=1 // pred_check
      _
    $region15: #{tpu_custom_call.1} parent=1 // pred_check_branch
      %875 = sbr.rel (0) target = $region17
    $region16: #{tpu_custom_call.1} parent=1 // pred_region
      %s877 = ssub.s32 2048, 2048
      %878 = vsyncadd [#allocation3], %s877
      %s879 = sshll.u32 [#allocation2], 4
      %s880 = int_to_ptr.vmem [resolvable:$true] %s879
      %885 = dma.vmem_to_hbm [thread:$0]  %s880, 2048, %s3, [#allocation3], 64, 64, 4
    $region17: #{tpu_custom_call.1} parent=1 // pred_fallthru
      _
    // Predicated region
    $region18: #{tpu_custom_call.1} parent=1 // pred_check
      _
    $region19: #{tpu_custom_call.1} parent=1 // pred_check_branch
      %887 = sbr.rel (0) target = $region21
    $region20: #{tpu_custom_call.1} parent=1 // pred_region
      %888 = dma.done [#allocation3], 2048
    $region21: #{tpu_custom_call.1} parent=1 // pred_fallthru
      _
    %889 = vsyncpa [#allocation3], 1

</llo_original>
